<compile_context>
chip_gen: v7x
topology: tpu7x:2x2x1
jax: 0.10.0
libtpu: 0.0.40
codegen_flags: <defaults>
</compile_context>

<pallas_src>
import functools

import jax
import jax.numpy as jnp
from jax import lax
from jax.experimental import pallas as pl
from jax.experimental.pallas import tpu as pltpu

LANE = 128


def _round_up(x, m):
    return ((x + m - 1) // m) * m


def _pick_tm(M, cap=2048):
    """M tile: prefer an exact divisor of M (no padding) with >=2 grid steps."""
    c = min(cap, M)
    c -= c % 8
    for t in range(c, 7, -8):
        if M % t == 0 and M // t >= 2:
            return t, M
    if M % 8 == 0 and M <= cap:
        return M, M                      # single full-size tile
    tm = max(8, min(cap, _round_up(M, 128)))
    return tm, _round_up(M, tm)


def _pick_rp(hp, cap=8):
    """pooled-row tile: largest divisor of hp <= cap, preferring >=2 grid steps."""
    divs = [d for d in range(1, min(cap, hp) + 1) if hp % d == 0]
    two_step = [d for d in divs if hp // d >= 2]
    return max(two_step) if two_step else max(divs)


# --------------------------------------------------------------------------
# Kernel 1: conv (im2col matmul, bf16 -> f32 accum) + bias + ReLU -> bf16
#   BN scale pre-folded into the weights, BN shift into the bias.  Epilogue is
#   f32 add + max on the accumulator; single cast on the lane-dense store.
# --------------------------------------------------------------------------
def conv_bias_relu_kernel(p_ref, w_ref, b_ref, o_ref):
    acc = jnp.dot(p_ref[...], w_ref[...], preferred_element_type=jnp.float32)
    o_ref[...] = jnp.maximum(acc + b_ref[...], 0.0).astype(o_ref.dtype)


def conv_bias_relu(patches_bf16, w_bf16, bias_f32, *, tm):
    M_pad, Kdim = patches_bf16.shape
    _, Cp = w_bf16.shape
    assert M_pad % tm == 0
    return pl.pallas_call(
        conv_bias_relu_kernel,
        out_shape=jax.ShapeDtypeStruct((M_pad, Cp), jnp.bfloat16),
        grid=(M_pad // tm,),
        in_specs=[
            pl.BlockSpec((tm, Kdim), lambda i: (i, 0)),     # streamed M tiles
            pl.BlockSpec((Kdim, Cp), lambda i: (0, 0)),     # resident weights
            pl.BlockSpec((1, Cp), lambda i: (0, 0)),        # resident bias
        ],
        out_specs=pl.BlockSpec((tm, Cp), lambda i: (i, 0)),
        compiler_params=pltpu.CompilerParams(
            dimension_semantics=("parallel",),
            vmem_limit_bytes=32 * 1024 * 1024,
        ),
    )(patches_bf16, w_bf16, bias_f32)


# --------------------------------------------------------------------------
# Kernel 2: 3x3 stride-2 pad-1 max-pool + featureL2Norm, rp pooled rows / step.
#   Input feature map is viewed as (B, hp, 2, Wo, Cp) (free outer-dim split):
#     main block -> rows 2q, 2q+1 for each pooled row q of the tile
#     top block  -> the single halo row 2*p0-1 (clamped; zero-masked at r==0)
#   Row max is staged in a VMEM scratch with one zero column on the left (pool
#   padding; activations are >=0), then the 3 column windows are read back as
#   stride-2 slices and normalized with rsqrt(sum(x^2) + 1e-6).
# --------------------------------------------------------------------------
def pool_l2norm_kernel(rp, wp, main_ref, top_ref, o_ref, rmax_ref):
    r = pl.program_id(0)
    f32 = jnp.float32
    B = o_ref.shape[0]
    Cp = o_ref.shape[-1]
    Wo = main_ref.shape[3]

    row_a = main_ref[:, :, 0, :, :].astype(f32)          # rows 2q      (B,rp,Wo,Cp)
    row_b = main_ref[:, :, 1, :, :].astype(f32)          # rows 2q+1
    top = top_ref[:, :, 0, :, :].astype(f32)             # row 2*p0-1 (clamped)
    top = jnp.where(r > 0, top, jnp.zeros_like(top))     # image-top padding row
    if rp > 1:
        row_c = main_ref[:, : rp - 1, 1, :, :].astype(f32)   # rows 2q-1, q >= 1
        above = jnp.concatenate([top, row_c], axis=1)
    else:
        above = top
    rmax = jnp.maximum(jnp.maximum(row_a, row_b), above)  # 3x1 row max (B,rp,Wo,Cp)

    # stage with a single zero column on the left (pool padding; post-ReLU >= 0)
    rmax_ref[:, :, pl.ds(0, 1), :] = jnp.zeros((B, rp, 1, Cp), f32)
    rmax_ref[:, :, pl.ds(1, Wo), :] = rmax

    p0 = rmax_ref[:, :, pl.ds(0, wp, stride=2), :]        # cols 2c-1 (zero at c==0)
    p1 = rmax_ref[:, :, pl.ds(1, wp, stride=2), :]        # cols 2c
    p2 = rmax_ref[:, :, pl.ds(2, wp, stride=2), :]        # cols 2c+1
    pooled = jnp.maximum(jnp.maximum(p0, p1), p2)          # (B, rp, wp, Cp)

    ssq = jnp.sum(pooled * pooled, axis=-1, keepdims=True)
    o_ref[...] = (pooled * lax.rsqrt(ssq + 1e-6)).astype(o_ref.dtype)


def pool_l2norm(feat2, hp, wp, rp):
    B, hp_, two, Wo, Cp = feat2.shape
    assert hp_ == hp and two == 2 and hp % rp == 0
    kernel = functools.partial(pool_l2norm_kernel, rp, wp)
    return pl.pallas_call(
        kernel,
        out_shape=jax.ShapeDtypeStruct((B, hp, wp, Cp), jnp.float32),
        grid=(hp // rp,),
        in_specs=[
            # rp pooled rows -> their 2*rp feature rows
            pl.BlockSpec((B, rp, 2, Wo, Cp), lambda r: (0, r, 0, 0, 0)),
            # one halo row: absolute feature row 2*(r*rp) - 1, clamped at the top
            pl.BlockSpec((B, 1, 1, Wo, Cp),
                         lambda r: (0, jnp.maximum(r * rp - 1, 0), 1, 0, 0)),
        ],
        out_specs=pl.BlockSpec((B, rp, wp, Cp), lambda r: (0, r, 0, 0)),
        scratch_shapes=[pltpu.VMEM((B, rp, Wo + 1, Cp), jnp.float32)],
        compiler_params=pltpu.CompilerParams(
            dimension_semantics=("parallel",),
            vmem_limit_bytes=32 * 1024 * 1024,
        ),
    )(feat2, feat2)


# --------------------------------------------------------------------------
# Glue (plain JAX): im2col / param folding / padding / layout plumbing
# --------------------------------------------------------------------------
def _im2col(x_nhwc, k, stride, pad):
    B, H, W, Cin = x_nhwc.shape
    xpad = jnp.pad(x_nhwc, ((0, 0), (pad, pad), (pad, pad), (0, 0)))
    Ho = (H + 2 * pad - k) // stride + 1
    Wo = (W + 2 * pad - k) // stride + 1
    cols = []
    for di in range(k):
        for dj in range(k):
            cols.append(xpad[:, di:di + stride * Ho:stride,
                             dj:dj + stride * Wo:stride, :])
    patches = jnp.concatenate(cols, axis=-1)          # (B, Ho, Wo, k*k*Cin)
    return patches.reshape(B * Ho * Wo, k * k * Cin), Ho, Wo


def feature_extraction_forward(x_nchw, params):
    """stem conv -> BN -> ReLU -> maxpool 3x3/2 -> featureL2Norm (NCHW in/out)."""
    # NCHW -> NHWC, bf16 activations (patches are HBM-materialized in bf16)
    x = jnp.transpose(x_nchw, (0, 2, 3, 1)).astype(jnp.bfloat16)
    B = x.shape[0]

    w = params["conv_w"]                                          # (Cout, Cin, 7, 7)
    Cout = w.shape[0]
    Cp = _round_up(Cout, LANE)                                    # lane-dense channels

    # fold BatchNorm (eval mode): scale into weights, shift into bias
    scale = params["bn_gamma"] / jnp.sqrt(params["bn_var"] + 1e-5)
    bias = params["bn_beta"] - params["bn_mean"] * scale
    w_mat = jnp.transpose(w, (2, 3, 1, 0)).reshape(-1, Cout) * scale[None, :]
    w_mat = jnp.pad(w_mat, ((0, 0), (0, Cp - Cout))).astype(jnp.bfloat16)
    bias_p = jnp.pad(bias, (0, Cp - Cout)).reshape(1, Cp).astype(jnp.float32)

    patches, Ho, Wo = _im2col(x, k=7, stride=2, pad=3)            # bf16 (M, 147)
    M = patches.shape[0]
    tm, M_pad = _pick_tm(M)
    if M_pad != M:
        patches = jnp.pad(patches, ((0, M_pad - M), (0, 0)))

    feat = conv_bias_relu(patches, w_mat, bias_p, tm=tm)          # (M_pad, Cp) bf16
    if M_pad != M:
        feat = feat[:M]
    feat = feat.reshape(B, Ho, Wo, Cp)

    # make H/W even (a trailing zero row/col == pool padding since values >= 0)
    if (Ho % 2) or (Wo % 2):
        feat = jnp.pad(feat, ((0, 0), (0, Ho % 2), (0, Wo % 2), (0, 0)))
        Ho += Ho % 2
        Wo += Wo % 2
    hp, wp = Ho // 2, Wo // 2
    feat2 = feat.reshape(B, hp, 2, Wo, Cp)                        # free outer split

    rp = _pick_rp(hp)
    out = pool_l2norm(feat2, hp, wp, rp)                          # (B, hp, wp, Cp) f32
    out = out[..., :Cout]                                         # drop lane padding
    return jnp.transpose(out, (0, 3, 1, 2))                       # NHWC -> NCHW


# --------------------------------------------------------------------------
# Pure-JAX reference (mirrors the bf16 weight/activation quantization and the
# bf16 feature-map intermediate so the comparison isolates the kernel logic,
# not the precision choices).
# --------------------------------------------------------------------------
def reference_forward(x_nchw, params):
    scale = params["bn_gamma"] / jnp.sqrt(params["bn_var"] + 1e-5)
    bias = params["bn_beta"] - params["bn_mean"] * scale
    w = params["conv_w"] * scale[:, None, None, None]
    xq = x_nchw.astype(jnp.float32).astype(jnp.bfloat16).astype(jnp.float32)
    wq = w.astype(jnp.bfloat16).astype(jnp.float32)
    y = lax.conv_general_dilated(
        xq, wq, (2, 2), ((3, 3), (3, 3)),
        dimension_numbers=("NCHW", "OIHW", "NCHW"),
        preferred_element_type=jnp.float32)
    y = jnp.maximum(y + bias[None, :, None, None], 0.0)
    y = y.astype(jnp.bfloat16).astype(jnp.float32)                # bf16 intermediate
    y = lax.reduce_window(y, -jnp.inf, lax.max, (1, 1, 3, 3), (1, 1, 2, 2),
                          ((0, 0), (0, 0), (1, 1), (1, 1)))
    norm = jnp.sqrt(jnp.sum(y * y, axis=1, keepdims=True) + 1e-6)
    return y / norm


# --------------------------------------------------------------------------
if __name__ == "__main__":
    B, Cin, H, W = 2, 3, 16, 16
    Cout = 32

    key = jax.random.PRNGKey(0)
    k_img, k_w, k_g, k_b, k_m, k_v = jax.random.split(key, 6)

    image_batch = jax.random.normal(k_img, (B, Cin, H, W), dtype=jnp.float32)

    params = {
        "conv_w": 0.05 * jax.random.normal(k_w, (Cout, Cin, 7, 7), dtype=jnp.float32),
        "bn_gamma": 1.0 + 0.1 * jax.random.normal(k_g, (Cout,), dtype=jnp.float32),
        "bn_beta": 0.1 * jax.random.normal(k_b, (Cout,), dtype=jnp.float32),
        "bn_mean": 0.1 * jax.random.normal(k_m, (Cout,), dtype=jnp.float32),
        "bn_var": 0.5 + 0.1 * jnp.abs(jax.random.normal(k_v, (Cout,), dtype=jnp.float32)),
    }

    fwd = jax.jit(feature_extraction_forward)
    ref_fn = jax.jit(reference_forward)

    out = jax.block_until_ready(fwd(image_batch, params))
    ref = jax.block_until_ready(ref_fn(image_batch, params))

    assert out.shape == ref.shape == (B, Cout, 4, 4), (out.shape, ref.shape)
    max_err = float(jnp.max(jnp.abs(out - ref)))
    # tolerance accounts for the bf16 feature-map intermediate (1 ulp ~ 4e-3 rel)
    assert jnp.allclose(out, ref, rtol=3e-3, atol=3e-3), max_err

    print("KERNEL_OK")
</pallas_src>

<mosaic_0001>
module attributes {stable_mosaic.version = 11 : i64} {
  func.func @conv_bias_relu_kernel(%arg0: i32, %arg1: memref<64x147xbf16, #tpu.memory_space<vmem>>, %arg2: memref<147x128xbf16, #tpu.memory_space<vmem>>, %arg3: memref<1x128xf32, #tpu.memory_space<vmem>>, %arg4: memref<64x128xbf16, #tpu.memory_space<vmem>>) attributes {dimension_semantics = [#tpu.dimension_semantics<parallel>], iteration_bounds = array<i64: 2>, scalar_prefetch = 0 : i64, scratch_operands = 0 : i64, tpu.core_type = #tpu.core_type<tc>, window_params = [{transform_indices = @transform_0, window_bounds = array<i64: 64, 147>}, {pipeline_mode = #tpu.pipeline_mode<synchronous>, transform_indices = @transform_1, window_bounds = array<i64: 147, 128>}, {pipeline_mode = #tpu.pipeline_mode<synchronous>, transform_indices = @transform_2, window_bounds = array<i64: 1, 128>}, {transform_indices = @transform_3, window_bounds = array<i64: 64, 128>}]} {
    %c0 = arith.constant 0 : index
    %c0_0 = arith.constant 0 : index
    %0 = vector.load %arg1[%c0, %c0_0] : memref<64x147xbf16, #tpu.memory_space<vmem>>, vector<64x147xbf16>
    %c0_1 = arith.constant 0 : index
    %c0_2 = arith.constant 0 : index
    %1 = vector.load %arg2[%c0_1, %c0_2] : memref<147x128xbf16, #tpu.memory_space<vmem>>, vector<147x128xbf16>
    %cst = arith.constant dense<0.000000e+00> : vector<64x128xf32>
    %2 = tpu.matmul %0, %1, %cst {dimension_numbers = #tpu.dot_dimension_numbers<[1], [0], [0], [1], [0, 0, 1, 1], [], []>} : vector<64x147xbf16>, vector<147x128xbf16>, vector<64x128xf32> -> vector<64x128xf32>
    %c0_3 = arith.constant 0 : index
    %c0_4 = arith.constant 0 : index
    %3 = vector.load %arg3[%c0_3, %c0_4] : memref<1x128xf32, #tpu.memory_space<vmem>>, vector<1x128xf32>
    %4 = vector.broadcast %3 : vector<1x128xf32> to vector<64x128xf32>
    %5 = arith.addf %2, %4 : vector<64x128xf32>
    %cst_5 = arith.constant 0.000000e+00 : f32
    %6 = vector.broadcast %cst_5 : f32 to vector<64x128xf32>
    %7 = arith.maximumf %5, %6 : vector<64x128xf32>
    %8 = arith.truncf %7 : vector<64x128xf32> to vector<64x128xbf16>
    %c0_6 = arith.constant 0 : index
    %c0_7 = arith.constant 0 : index
    %9 = vector.load %arg4[%c0_6, %c0_7] : memref<64x128xbf16, #tpu.memory_space<vmem>>, vector<64x128xbf16>
    tpu.vector_store %arg4[%c0_6, %c0_7], %8 {strides = array<i32>} : memref<64x128xbf16, #tpu.memory_space<vmem>>, vector<64x128xbf16>,
    return
  }
  func.func @transform_0(%arg0: i32) -> (i32, i32) {
    %c0_i32 = arith.constant 0 : i32
    %c0_i32_0 = arith.constant 0 : i32
    return %arg0, %c0_i32 : i32, i32
  }
  func.func @transform_1(%arg0: i32) -> (i32, i32) {
    %c0_i32 = arith.constant 0 : i32
    %c0_i32_0 = arith.constant 0 : i32
    %c0_i32_1 = arith.constant 0 : i32
    return %c0_i32, %c0_i32_0 : i32, i32
  }
  func.func @transform_2(%arg0: i32) -> (i32, i32) {
    %c0_i32 = arith.constant 0 : i32
    %c0_i32_0 = arith.constant 0 : i32
    %c0_i32_1 = arith.constant 0 : i32
    return %c0_i32, %c0_i32_0 : i32, i32
  }
  func.func @transform_3(%arg0: i32) -> (i32, i32) {
    %c0_i32 = arith.constant 0 : i32
    %c0_i32_0 = arith.constant 0 : i32
    return %arg0, %c0_i32 : i32, i32
  }
}

module attributes {stable_mosaic.version = 11 : i64} {
  func.func @pool_l2norm_kernel(%arg0: i32, %arg1: memref<2x2x2x8x128xbf16, #tpu.memory_space<vmem>>, %arg2: memref<2x1x1x8x128xbf16, #tpu.memory_space<vmem>>, %arg3: memref<2x2x4x128xf32, #tpu.memory_space<vmem>>, %arg4: memref<2x2x9x128xf32, #tpu.memory_space<vmem>>) attributes {dimension_semantics = [#tpu.dimension_semantics<parallel>], iteration_bounds = array<i64: 2>, scalar_prefetch = 0 : i64, scratch_operands = 1 : i64, tpu.core_type = #tpu.core_type<tc>, window_params = [{transform_indices = @transform_0, window_bounds = array<i64: 2, 2, 2, 8, 128>}, {transform_indices = @transform_1, window_bounds = array<i64: 2, 1, 1, 8, 128>}, {transform_indices = @transform_2, window_bounds = array<i64: 2, 2, 4, 128>}]} {
    %c0 = arith.constant 0 : index
    %c0_0 = arith.constant 0 : index
    %c0_1 = arith.constant 0 : index
    %c0_2 = arith.constant 0 : index
    %c0_3 = arith.constant 0 : index
    %0 = vector.load %arg1[%c0, %c0_0, %c0_1, %c0_2, %c0_3] : memref<2x2x2x8x128xbf16, #tpu.memory_space<vmem>>, vector<2x2x1x8x128xbf16>
    %1 = vector.shape_cast %0 : vector<2x2x1x8x128xbf16> to vector<2x2x8x128xbf16>
    %2 = arith.extf %1 : vector<2x2x8x128xbf16> to vector<2x2x8x128xf32>
    %c0_4 = arith.constant 0 : index
    %c0_5 = arith.constant 0 : index
    %c1 = arith.constant 1 : index
    %c0_6 = arith.constant 0 : index
    %c0_7 = arith.constant 0 : index
    %3 = vector.load %arg1[%c0_4, %c0_5, %c1, %c0_6, %c0_7] : memref<2x2x2x8x128xbf16, #tpu.memory_space<vmem>>, vector<2x2x1x8x128xbf16>
    %4 = vector.shape_cast %3 : vector<2x2x1x8x128xbf16> to vector<2x2x8x128xbf16>
    %5 = arith.extf %4 : vector<2x2x8x128xbf16> to vector<2x2x8x128xf32>
    %c0_8 = arith.constant 0 : index
    %c0_9 = arith.constant 0 : index
    %c0_10 = arith.constant 0 : index
    %c0_11 = arith.constant 0 : index
    %c0_12 = arith.constant 0 : index
    %6 = vector.load %arg2[%c0_8, %c0_9, %c0_10, %c0_11, %c0_12] : memref<2x1x1x8x128xbf16, #tpu.memory_space<vmem>>, vector<2x1x1x8x128xbf16>
    %7 = vector.shape_cast %6 : vector<2x1x1x8x128xbf16> to vector<2x1x8x128xbf16>
    %8 = arith.extf %7 : vector<2x1x8x128xbf16> to vector<2x1x8x128xf32>
    %c0_i32 = arith.constant 0 : i32
    %9 = arith.cmpi sgt, %arg0, %c0_i32 : i32
    %cst = arith.constant 0.000000e+00 : f32
    %10 = vector.broadcast %cst : f32 to vector<2x1x8x128xf32>
    %11 = arith.select %9, %8, %10 : vector<2x1x8x128xf32>
    %c0_13 = arith.constant 0 : index
    %c0_14 = arith.constant 0 : index
    %c1_15 = arith.constant 1 : index
    %c0_16 = arith.constant 0 : index
    %c0_17 = arith.constant 0 : index
    %12 = vector.load %arg1[%c0_13, %c0_14, %c1_15, %c0_16, %c0_17] : memref<2x2x2x8x128xbf16, #tpu.memory_space<vmem>>, vector<2x1x1x8x128xbf16>
    %13 = vector.shape_cast %12 : vector<2x1x1x8x128xbf16> to vector<2x1x8x128xbf16>
    %14 = arith.extf %13 : vector<2x1x8x128xbf16> to vector<2x1x8x128xf32>
    %15 = tpu.concatenate %11, %14 in 1 : vector<2x1x8x128xf32>, vector<2x1x8x128xf32> -> vector<2x2x8x128xf32>
    %16 = arith.maximumf %2, %5 : vector<2x2x8x128xf32>
    %17 = arith.maximumf %16, %15 : vector<2x2x8x128xf32>
    %cst_18 = arith.constant 0.000000e+00 : f32
    %18 = vector.broadcast %cst_18 : f32 to vector<2x2x1x128xf32>
    %c0_19 = arith.constant 0 : index
    %c0_20 = arith.constant 0 : index
    %c0_21 = arith.constant 0 : index
    %c0_22 = arith.constant 0 : index
    %19 = vector.load %arg4[%c0_19, %c0_20, %c0_21, %c0_22] : memref<2x2x9x128xf32, #tpu.memory_space<vmem>>, vector<2x2x1x128xf32>
    tpu.vector_store %arg4[%c0_19, %c0_20, %c0_21, %c0_22], %18 {strides = array<i32>} : memref<2x2x9x128xf32, #tpu.memory_space<vmem>>, vector<2x2x1x128xf32>,
    %c0_23 = arith.constant 0 : index
    %c0_24 = arith.constant 0 : index
    %c1_25 = arith.constant 1 : index
    %c0_26 = arith.constant 0 : index
    %20 = vector.load %arg4[%c0_23, %c0_24, %c1_25, %c0_26] : memref<2x2x9x128xf32, #tpu.memory_space<vmem>>, vector<2x2x8x128xf32>
    tpu.vector_store %arg4[%c0_23, %c0_24, %c1_25, %c0_26], %17 {strides = array<i32>} : memref<2x2x9x128xf32, #tpu.memory_space<vmem>>, vector<2x2x8x128xf32>,
    %c0_27 = arith.constant 0 : index
    %c0_28 = arith.constant 0 : index
    %c0_29 = arith.constant 0 : index
    %c0_30 = arith.constant 0 : index
    %21 = tpu.strided_load %arg4[%c0_27, %c0_28, %c0_29, %c0_30] {strides = array<i32: 1, 1, 2, 1>} : memref<2x2x9x128xf32, #tpu.memory_space<vmem>>, vector<2x2x4x128xf32>
    %c0_31 = arith.constant 0 : index
    %c0_32 = arith.constant 0 : index
    %c1_33 = arith.constant 1 : index
    %c0_34 = arith.constant 0 : index
    %22 = tpu.strided_load %arg4[%c0_31, %c0_32, %c1_33, %c0_34] {strides = array<i32: 1, 1, 2, 1>} : memref<2x2x9x128xf32, #tpu.memory_space<vmem>>, vector<2x2x4x128xf32>
    %c0_35 = arith.constant 0 : index
    %c0_36 = arith.constant 0 : index
    %c2 = arith.constant 2 : index
    %c0_37 = arith.constant 0 : index
    %23 = tpu.strided_load %arg4[%c0_35, %c0_36, %c2, %c0_37] {strides = array<i32: 1, 1, 2, 1>} : memref<2x2x9x128xf32, #tpu.memory_space<vmem>>, vector<2x2x4x128xf32>
    %24 = arith.maximumf %21, %22 : vector<2x2x4x128xf32>
    %25 = arith.maximumf %24, %23 : vector<2x2x4x128xf32>
    %26 = arith.mulf %25, %25 : vector<2x2x4x128xf32>
    %cst_38 = arith.constant dense<0.000000e+00> : vector<2x2x4xf32>
    %27 = vector.multi_reduction <add>, %26, %cst_38 [3] : vector<2x2x4x128xf32> to vector<2x2x4xf32>
    %28 = vector.shape_cast %27 : vector<2x2x4xf32> to vector<2x2x4x1xf32>
    %cst_39 = arith.constant 9.99999997E-7 : f32
    %29 = vector.broadcast %cst_39 : f32 to vector<2x2x4x1xf32>
    %30 = arith.addf %28, %29 : vector<2x2x4x1xf32>
    %31 = math.rsqrt %30 : vector<2x2x4x1xf32>
    %32 = vector.broadcast %31 : vector<2x2x4x1xf32> to vector<2x2x4x128xf32>
    %33 = arith.mulf %25, %32 : vector<2x2x4x128xf32>
    %c0_40 = arith.constant 0 : index
    %c0_41 = arith.constant 0 : index
    %c0_42 = arith.constant 0 : index
    %c0_43 = arith.constant 0 : index
    %34 = vector.load %arg3[%c0_40, %c0_41, %c0_42, %c0_43] : memref<2x2x4x128xf32, #tpu.memory_space<vmem>>, vector<2x2x4x128xf32>
    tpu.vector_store %arg3[%c0_40, %c0_41, %c0_42, %c0_43], %33 {strides = array<i32>} : memref<2x2x4x128xf32, #tpu.memory_space<vmem>>, vector<2x2x4x128xf32>,
    return
  }
  func.func @transform_0(%arg0: i32) -> (i32, i32, i32, i32, i32) {
    %c0_i32 = arith.constant 0 : i32
    %c0_i32_0 = arith.constant 0 : i32
    %c0_i32_1 = arith.constant 0 : i32
    %c0_i32_2 = arith.constant 0 : i32
    %c0_i32_3 = arith.constant 0 : i32
    return %c0_i32, %arg0, %c0_i32_0, %c0_i32_1, %c0_i32_2 : i32, i32, i32, i32, i32
  }
  func.func @transform_1(%arg0: i32) -> (i32, i32, i32, i32, i32) {
    %c2_i32 = arith.constant 2 : i32
    %0 = arith.muli %arg0, %c2_i32 : i32
    %c1_i32 = arith.constant 1 : i32
    %1 = arith.subi %0, %c1_i32 : i32
    %c0_i32 = arith.constant 0 : i32
    %2 = arith.maxsi %1, %c0_i32 : i32
    %c0_i32_0 = arith.constant 0 : i32
    %c1_i32_1 = arith.constant 1 : i32
    %c0_i32_2 = arith.constant 0 : i32
    %c0_i32_3 = arith.constant 0 : i32
    %c0_i32_4 = arith.constant 0 : i32
    return %c0_i32_0, %2, %c1_i32_1, %c0_i32_2, %c0_i32_3 : i32, i32, i32, i32, i32
  }
  func.func @transform_2(%arg0: i32) -> (i32, i32, i32, i32) {
    %c0_i32 = arith.constant 0 : i32
    %c0_i32_0 = arith.constant 0 : i32
    %c0_i32_1 = arith.constant 0 : i32
    %c0_i32_2 = arith.constant 0 : i32
    return %c0_i32, %arg0, %c0_i32_0, %c0_i32_1 : i32, i32, i32, i32
  }
}

</mosaic_0001>

<llo_original>
// kernel: feature_extraction_forward.2
$region0: #{feature_extraction_forward.2}
  #allocation0 [shape = 'u32[]', space=smem, size = 0x4, offset = 0x4, fixed_abs, tag = 'smem constant byte address 0x4 - core index']
  #allocation1 [shape = 'u32[144,128]{1,0:T(1,128)}', space=vmem, size = 0x12000, scoped, tag = 'internal scratch']
  %s0 = inlined_call_operand.vmem [shape: bf16[128,147], index: 0, kind: input, shape index: {}]
  %s1 = inlined_call_operand.vmem [shape: bf16[147,128], index: 1, kind: input, shape index: {}]
  %s2 = inlined_call_operand.vmem [shape: f32[1,128], index: 2, kind: input, shape index: {}]
  %s3 = inlined_call_operand.vmem [shape: bf16[128,128], index: 3, kind: output, shape index: {}]
  %s4 = sld [smem:[#allocation0]]
  $region45: #{feature_extraction_forward.2} parent=0
    _
  %s6 = ssub.s32 1, %s4
  %s7 = scalar_select 0, %s6, %s4
  loop: start=0, step=1, limit=4
  $region2: #{feature_extraction_forward.2} parent=0 // loop_pre_header
    _
  $region3: #{feature_extraction_forward.2} parent=0 // loop_header
    %s9 = sphi 0, %s13
    %p10 = scmp.ge.s32.totalorder %s9, 4
    %s19 = sphi 0, %s21
    %s22 = sphi 0, %s19
    %s23 = sphi 0, %s22
    %s39 = sphi 0, %s23
    %s43 = sphi 0, %s43
    %s45 = sphi 0, %s43
    %s46 = sphi 0, %s45
    %s60 = sphi 0, %s46
    %s64 = sphi 0, %s64
    %s66 = sphi 0, %s64
    %s67 = sphi 0, %s66
    %s81 = sphi 0, %s67
    %s87 = sphi 0, %s89
    %s90 = sphi 0, %s87
    %s91 = sphi 0, %s90
    %s107 = sphi 0, %s91
  $region4: #{feature_extraction_forward.2} parent=0 // loop_header_branch
    %12 = sbr.rel (%p10) target = $region8
  $region5: #{feature_extraction_forward.2} parent=0 // loop_body
    %s14 = ssub.s32 %s9, 1
    %s15 = ssub.s32 %s9, 2
    %s16 = sadd.s32 %s9, 1
    %s17 = ssub.s32 %s9, %s16
    %p18 = scmp.eq.s32.totalorder %s17, 0
    %s20 = sadd.s32 %s19, 1
    %s21 = scalar_select %p18, %s19, %s20
    %p24 = pneg %p18
    %p25 = scmp.eq.s32.totalorder %s9, 1
    %p26 = por %p24, %p25
    %p27 = scmp.ne.s32.totalorder %s19, %s22
    %p28 = scmp.eq.s32.totalorder %s9, 0
    %p29 = por %p27, %p28
    %p30 = scmp.ne.s32.totalorder %s19, %s22
    %p31 = scmp.eq.s32.totalorder %s14, 1
    %p32 = por %p30, %p31
    %p33 = scmp.ne.s32.totalorder %s22, %s23
    %p34 = scmp.eq.s32.totalorder %s14, 0
    %p35 = por %p33, %p34
    %p36 = scmp.ne.s32.totalorder %s22, %s23
    %p37 = scmp.eq.s32.totalorder %s15, 1
    %p38 = por %p36, %p37
    %p40 = scmp.ne.s32.totalorder %s23, %s39
    %p41 = scmp.eq.s32.totalorder %s15, 0
    %p42 = por %p40, %p41
    %s44 = sadd.s32 %s43, 1
    %p47 = scmp.eq.s32.totalorder %s9, 1
    %p48 = scmp.ne.s32.totalorder %s43, %s45
    %p49 = scmp.eq.s32.totalorder %s9, 0
    %p50 = por %p48, %p49
    %p51 = scmp.ne.s32.totalorder %s43, %s45
    %p52 = scmp.eq.s32.totalorder %s14, 1
    %p53 = por %p51, %p52
    %p54 = scmp.ne.s32.totalorder %s45, %s46
    %p55 = scmp.eq.s32.totalorder %s14, 0
    %p56 = por %p54, %p55
    %p57 = scmp.ne.s32.totalorder %s45, %s46
    %p58 = scmp.eq.s32.totalorder %s15, 1
    %p59 = por %p57, %p58
    %p61 = scmp.ne.s32.totalorder %s46, %s60
    %p62 = scmp.eq.s32.totalorder %s15, 0
    %p63 = por %p61, %p62
    %s65 = sadd.s32 %s64, 1
    %p68 = scmp.eq.s32.totalorder %s9, 1
    %p69 = scmp.ne.s32.totalorder %s64, %s66
    %p70 = scmp.eq.s32.totalorder %s9, 0
    %p71 = por %p69, %p70
    %p72 = scmp.ne.s32.totalorder %s64, %s66
    %p73 = scmp.eq.s32.totalorder %s14, 1
    %p74 = por %p72, %p73
    %p75 = scmp.ne.s32.totalorder %s66, %s67
    %p76 = scmp.eq.s32.totalorder %s14, 0
    %p77 = por %p75, %p76
    %p78 = scmp.ne.s32.totalorder %s66, %s67
    %p79 = scmp.eq.s32.totalorder %s15, 1
    %p80 = por %p78, %p79
    %p82 = scmp.ne.s32.totalorder %s67, %s81
    %p83 = scmp.eq.s32.totalorder %s15, 0
    %p84 = por %p82, %p83
    %s85 = ssub.s32 %s9, %s16
    %p86 = scmp.eq.s32.totalorder %s85, 0
    %s88 = sadd.s32 %s87, 1
    %s89 = scalar_select %p86, %s87, %s88
    %p92 = pneg %p86
    %p93 = scmp.eq.s32.totalorder %s9, 1
    %p94 = por %p92, %p93
    %p95 = scmp.ne.s32.totalorder %s87, %s90
    %p96 = scmp.eq.s32.totalorder %s9, 0
    %p97 = por %p95, %p96
    %p98 = scmp.ne.s32.totalorder %s87, %s90
    %p99 = scmp.eq.s32.totalorder %s14, 1
    %p100 = por %p98, %p99
    %p101 = scmp.ne.s32.totalorder %s90, %s91
    %p102 = scmp.eq.s32.totalorder %s14, 0
    %p103 = por %p101, %p102
    %p104 = scmp.ne.s32.totalorder %s90, %s91
    %p105 = scmp.eq.s32.totalorder %s15, 1
    %p106 = por %p104, %p105
    %p108 = scmp.ne.s32.totalorder %s91, %s107
    %p109 = scmp.eq.s32.totalorder %s15, 0
    %p110 = por %p108, %p109
    %p111 = scmp.le.s32.totalorder 1, %s9
    %p112 = scmp.lt.s32.totalorder %s9, 3
    %p113 = pnand %p111, %p112
    %p114 = pneg %p113
    // Predicated region
    $region9: #{feature_extraction_forward.2} parent=5 // pred_check
      _
    $region10: #{feature_extraction_forward.2} parent=5 // pred_check_branch
      %116 = sbr.rel (%p113) target = $region12
    $region11: #{feature_extraction_forward.2} parent=5 // pred_region
      %s117 = ssub.s32 %s9, 1
      // Predicated region
      $region13: #{feature_extraction_forward.2} parent=11 // pred_check
        %p118 = pneg %p56
      $region14: #{feature_extraction_forward.2} parent=11 // pred_check_branch
        %120 = sbr.rel (%p118) target = $region16
      $region15: #{feature_extraction_forward.2} parent=11 // pred_region
        _
      $region16: #{feature_extraction_forward.2} parent=11 // pred_fallthru
        _
      // Predicated region
      $region17: #{feature_extraction_forward.2} parent=11 // pred_check
        %p121 = pneg %p77
      $region18: #{feature_extraction_forward.2} parent=11 // pred_check_branch
        %123 = sbr.rel (%p121) target = $region20
      $region19: #{feature_extraction_forward.2} parent=11 // pred_region
        _
      $region20: #{feature_extraction_forward.2} parent=11 // pred_fallthru
        _
    $region12: #{feature_extraction_forward.2} parent=5 // pred_fallthru
      _
    %p124 = scmp.lt.s32.totalorder %s9, 2
    // Predicated region
    $region21: #{feature_extraction_forward.2} parent=5 // pred_check
      %p125 = pneg %p124
    $region22: #{feature_extraction_forward.2} parent=5 // pred_check_branch
      %127 = sbr.rel (%p125) target = $region24
    $region23: #{feature_extraction_forward.2} parent=5 // pred_region
      // Predicated region
      $region25: #{feature_extraction_forward.2} parent=23 // pred_check
        %p128 = pneg %p29
      $region26: #{feature_extraction_forward.2} parent=23 // pred_check_branch
        %130 = sbr.rel (%p128) target = $region28
      $region27: #{feature_extraction_forward.2} parent=23 // pred_region
        %s131 = smul.u32 8, %s9
        %p132 = scmp.lt.s32.totalorder %s131, 15
        %s133 = scalar_select %p132, %s131, 15
        %s134 = smul.addr %s133, 2
        %s135 = smul.addr %s134, 4
        %s136 = scalar_lea.vmem %s0, %s135
        %s137 = smul.u32 8, %s9
      $region28: #{feature_extraction_forward.2} parent=23 // pred_fallthru
        _
    $region24: #{feature_extraction_forward.2} parent=5 // pred_fallthru
      _
    %p138 = scmp.le.s32.totalorder 1, %s9
    %p139 = scmp.lt.s32.totalorder %s9, 3
    %p140 = pnand %p138, %p139
    %p141 = pneg %p140
    // Predicated region
    $region29: #{feature_extraction_forward.2} parent=5 // pred_check
      _
    $region30: #{feature_extraction_forward.2} parent=5 // pred_check_branch
      %143 = sbr.rel (%p140) target = $region32
    $region31: #{feature_extraction_forward.2} parent=5 // pred_region
      %s144 = ssub.s32 %s9, 1
      %s145 = smul.u32 8, %s14
      %p146 = scmp.lt.s32.totalorder %s145, 15
      %s147 = scalar_select %p146, %s145, 15
      %s148 = smul.addr %s147, 2
      %s149 = smul.addr %s148, 4
      %s150 = scalar_lea.vmem %s0, %s149
      %p151 = pneg %p35
      %p152 = pneg %p32
      %p153 = pneg %p56
      %p154 = pneg %p53
      %p155 = pneg %p77
      %p156 = pneg %p74
      %p157 = pneg %p103
      %p158 = pneg %p100
      %s159 = smul.u32 8, %s14
      %p160 = scmp.lt.s32.totalorder %s159, 15
      %s161 = scalar_select %p160, %s159, 15
      %s162 = smul.addr %s161, 4
      %s163 = scalar_lea.vmem %s3, %s162
      %s164 = smul.u32 8, %s14
      %p165 = scmp.lt.s32.totalorder %s164, 15
      %s166 = scalar_select %p165, %s164, 15
      %s167 = smul.addr %s166, 2
      %s168 = smul.addr %s167, 4
      %s169 = scalar_lea.vmem %s0, %s168
      %s170 = smul.u32 8, %s14
      %s171 = smul.u32 8, %s14
      %p172 = scmp.lt.s32.totalorder %s171, 15
      %s173 = scalar_select %p172, %s171, 15
      %s174 = smul.addr %s173, 4
      %s175 = scalar_lea.vmem %s3, %s174
      %s176 = smul.u32 8, %s14
      %v178 = vld [vmem:[%s169] sm:$0xff]
      %v179 = vld [vmem:[%s169 + $0x8] sm:$0xff]
      %v180 = vld [vmem:[%s169 + $0x10] sm:$0xff]
      %v181 = vld [vmem:[%s169 + $0x18] sm:$0xff]
      %v182 = vld [vmem:[%s169 + $0x20] sm:$0xff]
      %v183 = vld [vmem:[%s169 + $0x28] sm:$0xff]
      %v184 = vld [vmem:[%s169 + $0x30] sm:$0xff]
      %v185 = vld [vmem:[%s169 + $0x38] sm:$0xff]
      %v186 = vld [vmem:[%s1] sm:$0xf]
      %v187 = vld [vmem:[%s1 + $0x4] sm:$0xf]
      %v188 = vld [vmem:[%s1 + $0x8] sm:$0xf]
      %v189 = vld [vmem:[%s1 + $0xc] sm:$0xf]
      %v190 = vld [vmem:[%s1 + $0x10] sm:$0xf]
      %v191 = vld [vmem:[%s1 + $0x14] sm:$0xf]
      %v192 = vld [vmem:[%s1 + $0x18] sm:$0xf]
      %v193 = vld [vmem:[%s1 + $0x1c] sm:$0xf]
      %v194 = vld [vmem:[%s1 + $0x20] sm:$0xf]
      %v195 = vld [vmem:[%s1 + $0x24] sm:$0xf]
      %v196 = vld [vmem:[%s1 + $0x28] sm:$0xf]
      %v197 = vld [vmem:[%s1 + $0x2c] sm:$0xf]
      %v198 = vld [vmem:[%s1 + $0x30] sm:$0xf]
      %v199 = vld [vmem:[%s1 + $0x34] sm:$0xf]
      %v200 = vld [vmem:[%s1 + $0x38] sm:$0xf]
      %v201 = vld [vmem:[%s1 + $0x3c] sm:$0xf]
      %v202 = vld [vmem:[%s1 + $0x40] sm:$0xf]
      %v203 = vld [vmem:[%s1 + $0x44] sm:$0xf]
      %v204 = vld [vmem:[%s1 + $0x48] sm:$0x3]
      %v205 = vld [vmem:[%s2] sm:$0x1]
      %v207 = vlaneseq
      %v208 = vshrl.u32 %v207, 7
      %v209 = vsub.s32 0, %v208
      %v210 = vrot.slane %v205, %v209
      %v220 = vunpack.c.l.b16 %v178
      %v221 = vunpack.c.h.b16 %v178
      %v222 = vunpack.c.l.b16 %v179
      %v223 = vunpack.c.h.b16 %v179
      %v224 = vunpack.c.l.b16 %v180
      %v225 = vunpack.c.h.b16 %v180
      %v226 = vunpack.c.l.b16 %v181
      %v227 = vunpack.c.h.b16 %v181
      %v228 = vunpack.c.l.b16 %v182
      %v229 = vunpack.c.h.b16 %v182
      %v230 = vunpack.c.l.b16 %v183
      %v231 = vunpack.c.h.b16 %v183
      %v232 = vunpack.c.l.b16 %v184
      %v233 = vunpack.c.h.b16 %v184
      %v234 = vunpack.c.l.b16 %v185
      %v235 = vunpack.c.h.b16 %v185
      %v236 = vpack.c.b16 %v222, %v220
      %v237 = vpack.c.b16 %v223, %v221
      %v238 = vpack.c.b16 %v226, %v224
      %v239 = vpack.c.b16 %v227, %v225
      %v240 = vpack.c.b16 %v230, %v228
      %v241 = vpack.c.b16 %v231, %v229
      %v242 = vpack.c.b16 %v234, %v232
      %v243 = vpack.c.b16 %v235, %v233
      %v267 = vunpack.c.l.b16 %v186
      %v268 = vunpack.c.l.b16 %v187
      %v269 = vunpack.c.l.b16 %v188
      %v270 = vunpack.c.l.b16 %v189
      %v271 = vunpack.c.l.b16 %v190
      %v272 = vunpack.c.l.b16 %v191
      %v273 = vunpack.c.l.b16 %v192
      %v274 = vunpack.c.l.b16 %v193
      %v275 = vunpack.c.l.b16 %v194
      %v276 = vunpack.c.l.b16 %v195
      %v277 = vunpack.c.l.b16 %v196
      %v278 = vunpack.c.l.b16 %v197
      %v279 = vunpack.c.l.b16 %v198
      %v280 = vunpack.c.l.b16 %v199
      %v281 = vunpack.c.l.b16 %v200
      %v282 = vunpack.c.l.b16 %v201
      %v283 = vunpack.c.l.b16 %v202
      %v284 = vunpack.c.l.b16 %v203
      %v285 = vunpack.c.l.b16 %v204
      %v286 = vpack.c.b16 %v268, %v267
      %v287 = vpack.c.b16 %v270, %v269
      %v288 = vpack.c.b16 %v272, %v271
      %v289 = vpack.c.b16 %v274, %v273
      %v290 = vpack.c.b16 %v276, %v275
      %v291 = vpack.c.b16 %v278, %v277
      %v292 = vpack.c.b16 %v280, %v279
      %v293 = vpack.c.b16 %v282, %v281
      %v294 = vpack.c.b16 %v284, %v283
      %v295 = vpack.c.b16 %v285, %v285
      %vm305 = vcmask 154624
      %v307 = vsel %vm305, %v237, 0
      %v310 = vsel %vm305, %v239, 0
      %v313 = vsel %vm305, %v241, 0
      %v316 = vsel %vm305, %v243, 0
      %vm318 = vcmask 1040384
      %vm319 = vcmask 1041408
      %v320 = vsel %vm318, 4294967295, 65535
      %v321 = vsel %vm319, %v320, 0
      %v323 = vand.u32 %v295, %v321
      %325 = vmatprep.subr.bf16.mxu0 0
      %326 = vmatpush1.bf16.msra.mxu0 %v286
      %327 = vmatprep.subr.bf16.mxu0 0
      %328 = vmatpush1.bf16.msra.mxu0 %v287
      %329 = vmatprep.subr.bf16.mxu0 0
      %330 = vmatpush1.bf16.msra.mxu0 %v288
      %331 = vmatprep.subr.bf16.mxu0 0
      %332 = vmatpush1.bf16.msra.mxu0 %v289
      %333 = vmatprep.subr.bf16.mxu0 0
      %334 = vmatpush1.bf16.msra.mxu0 %v290
      %335 = vmatprep.subr.bf16.mxu0 0
      %336 = vmatpush1.bf16.msra.mxu0 %v291
      %337 = vmatprep.subr.bf16.mxu0 0
      %338 = vmatpush1.bf16.msra.mxu0 %v292
      %339 = vmatprep.subr.bf16.mxu0 0
      %340 = vmatpush1.bf16.msra.mxu0 %v293
      %341 = vmatprep.subr.bf16.mxu0 0
      %342 = vmatpush1.bf16.msra.mxu0 %v294
      %343 = vmatprep.subr.bf16.mxu0 0
      %344 = vmatpush1.bf16.msra.mxu0 %v323
      %345 = vmatprep.subr.bf16.mxu0 0
      %346 = vmatpush1.bf16.msra.mxu0 0
      %347 = vmatprep.subr.bf16.mxu0 0
      %348 = vmatpush1.bf16.msra.mxu0 0
      %349 = vmatprep.subr.bf16.mxu0 0
      %350 = vmatpush1.bf16.msra.mxu0 0
      %351 = vmatprep.subr.bf16.mxu0 0
      %352 = vmatpush1.bf16.msra.mxu0 0
      %353 = vmatprep.subr.bf16.mxu0 0
      %354 = vmatpush1.bf16.msra.mxu0 0
      %355 = vmatprep.subr.bf16.mxu0 0
      %356 = vmatpush1.bf16.msra.mxu0 0
      %357 = vmatprep.mubr.bf16.mxu0 %v307
      %358 = vmatmul.mubr.bf16.gmra.mrb[0].mxu0 %v236
      %v359 = vpop.f32.mrb[0].mxu0
      %v360 = vadd.f32 %v210, %v359
      %v361 = vpop.f32.mrb[0].mxu0
      %v362 = vpop.f32.mrb[0].mxu0
      %v363 = vadd.f32 %v210, %v362
      %v364 = vpop.f32.mrb[0].mxu0
      %365 = vmatprep.mubr.bf16.mxu0 %v310
      %366 = vmatmul.mubr.bf16.gmra.mrb[0].mxu0 %v238
      %v367 = vpop.f32.mrb[0].mxu0
      %v368 = vadd.f32 %v210, %v367
      %v369 = vpop.f32.mrb[0].mxu0
      %v370 = vpop.f32.mrb[0].mxu0
      %v371 = vadd.f32 %v210, %v370
      %v372 = vpop.f32.mrb[0].mxu0
      %373 = vmatprep.mubr.bf16.mxu0 %v313
      %374 = vmatmul.mubr.bf16.gmra.mrb[0].mxu0 %v240
      %v375 = vpop.f32.mrb[0].mxu0
      %v376 = vadd.f32 %v210, %v375
      %v377 = vpop.f32.mrb[0].mxu0
      %v378 = vpop.f32.mrb[0].mxu0
      %v379 = vadd.f32 %v210, %v378
      %v380 = vpop.f32.mrb[0].mxu0
      %381 = vmatprep.mubr.bf16.mxu0 %v316
      %382 = vmatmul.mubr.bf16.gmra.mrb[0].mxu0 %v242
      %v383 = vpop.f32.mrb[0].mxu0
      %v384 = vadd.f32 %v210, %v383
      %v385 = vpop.f32.mrb[0].mxu0
      %v386 = vpop.f32.mrb[0].mxu0
      %v387 = vadd.f32 %v210, %v386
      %v388 = vpop.f32.mrb[0].mxu0
      %389 = vdwg.mxu0
      %v390 = vmax.f32 %v360, 0.0
      %v391 = vmax.f32 %v363, 0.0
      %v392 = vmax.f32 %v368, 0.0
      %v393 = vmax.f32 %v371, 0.0
      %v394 = vmax.f32 %v376, 0.0
      %v395 = vmax.f32 %v379, 0.0
      %v396 = vmax.f32 %v384, 0.0
      %v397 = vmax.f32 %v387, 0.0
      %v398 = vpack.c.bf16 %v391, %v390
      %v399 = vpack.c.bf16 %v393, %v392
      %v400 = vpack.c.bf16 %v395, %v394
      %v401 = vpack.c.bf16 %v397, %v396
      %v406 = vunpack.c.l.b16 %v398
      %v407 = vunpack.c.h.b16 %v398
      %v408 = vunpack.c.l.b16 %v399
      %v409 = vunpack.c.h.b16 %v399
      %v410 = vunpack.c.l.b16 %v400
      %v411 = vunpack.c.h.b16 %v400
      %v412 = vunpack.c.l.b16 %v401
      %v413 = vunpack.c.h.b16 %v401
      %v414 = vpack.c.b16 %v406, %v406
      %v415 = vpack.c.b16 %v407, %v407
      %v416 = vpack.c.b16 %v408, %v408
      %v417 = vpack.c.b16 %v409, %v409
      %v418 = vpack.c.b16 %v410, %v410
      %v419 = vpack.c.b16 %v411, %v411
      %v420 = vpack.c.b16 %v412, %v412
      %v421 = vpack.c.b16 %v413, %v413
      %430 = vst [vmem:[%s175] sm:$0xf] %v414
      %431 = vst [vmem:[%s175 + $0x4] sm:$0xf] %v415
      %432 = vst [vmem:[%s175 + $0x8] sm:$0xf] %v416
      %433 = vst [vmem:[%s175 + $0xc] sm:$0xf] %v417
      %434 = vst [vmem:[%s175 + $0x10] sm:$0xf] %v418
      %435 = vst [vmem:[%s175 + $0x14] sm:$0xf] %v419
      %436 = vst [vmem:[%s175 + $0x18] sm:$0xf] %v420
      %437 = vst [vmem:[%s175 + $0x1c] sm:$0xf] %v421
      %s438 = smul.u32 8, %s14
      %p439 = scmp.lt.s32.totalorder %s438, 15
      %s440 = scalar_select %p439, %s438, 15
      %s441 = smul.addr %s440, 4
      %s442 = scalar_lea.vmem %s3, %s441
      // Predicated region
      $region33: #{feature_extraction_forward.2} parent=31 // pred_check
        %p443 = pneg %p100
      $region34: #{feature_extraction_forward.2} parent=31 // pred_check_branch
        %445 = sbr.rel (%p443) target = $region36
      $region35: #{feature_extraction_forward.2} parent=31 // pred_region
        %s446 = smul.u32 8, %s14
      $region36: #{feature_extraction_forward.2} parent=31 // pred_fallthru
        _
    $region32: #{feature_extraction_forward.2} parent=5 // pred_fallthru
      _
    %p447 = scmp.le.s32.totalorder 2, %s9
    // Predicated region
    $region37: #{feature_extraction_forward.2} parent=5 // pred_check
      %p448 = pneg %p447
    $region38: #{feature_extraction_forward.2} parent=5 // pred_check_branch
      %450 = sbr.rel (%p448) target = $region40
    $region39: #{feature_extraction_forward.2} parent=5 // pred_region
      %s451 = ssub.s32 %s9, 2
      // Predicated region
      $region41: #{feature_extraction_forward.2} parent=39 // pred_check
        %p452 = pneg %p106
      $region42: #{feature_extraction_forward.2} parent=39 // pred_check_branch
        %454 = sbr.rel (%p452) target = $region44
      $region43: #{feature_extraction_forward.2} parent=39 // pred_region
        %s455 = smul.u32 8, %s15
        %p456 = scmp.lt.s32.totalorder %s455, 15
        %s457 = scalar_select %p456, %s455, 15
        %s458 = smul.addr %s457, 4
        %s459 = scalar_lea.vmem %s3, %s458
      $region44: #{feature_extraction_forward.2} parent=39 // pred_fallthru
        _
    $region40: #{feature_extraction_forward.2} parent=5 // pred_fallthru
      _
  $region6: #{feature_extraction_forward.2} parent=0 // loop_footer
    %s13 = sadd.s32 1, %s9
  $region7: #{feature_extraction_forward.2} parent=0 // loop_footer_branch
    %8 = sbr.rel target = $region3
  $region8: #{feature_extraction_forward.2} parent=0 // loop_exit
    _

// kernel: feature_extraction_forward.3
$region0: #{feature_extraction_forward.3}
  #allocation0 [shape = 'u32[]', space=smem, size = 0x4, offset = 0x4, fixed_abs, tag = 'smem constant byte address 0x4 - core index']
  #allocation1 [shape = 'u32[144,128]{1,0:T(1,128)}', space=vmem, size = 0x12000, scoped, tag = 'internal scratch']
  #allocation2 [shape = 'f32[2,2,9,128]{3,2,1,0:T(8,128)}', space=vmem, size = 0x8000, scoped, tag = 'scratch operand']
  %s0 = inlined_call_operand.vmem [shape: bf16[2,4,2,8,128], index: 0, kind: input, shape index: {}, may-alias: {0,1}]
  %s1 = inlined_call_operand.vmem [shape: bf16[2,4,2,8,128], index: 1, kind: input, shape index: {}, may-alias: {0,1}]
  %s2 = inlined_call_operand.vmem [shape: f32[2,4,4,128], index: 2, kind: output, shape index: {}]
  %s3 = sld [smem:[#allocation0]]
  $region160: #{feature_extraction_forward.3} parent=0
    _
  %s5 = ssub.s32 1, %s3
  %s6 = scalar_select 0, %s5, %s3
  $region1: #{feature_extraction_forward.3} parent=0
    #allocation3 [shape = 'u8[32768]{0}', space=vmem, size = 0x8000, scoped, tag = 'input window, operand 0']
    #allocation4 [shape = 'u8[8192]{0}', space=vmem, size = 0x2000, scoped, tag = 'input window, operand 1']
    #allocation5 [shape = 'u8[16384]{0}', space=vmem, size = 0x4000, scoped, tag = 'output window, operand 0']
    loop: start=0, step=1, limit=4
    $region2: #{feature_extraction_forward.3} parent=1 // loop_pre_header
      _
    $region3: #{feature_extraction_forward.3} parent=1 // loop_header
      %s8 = sphi 0, %s12
      %p9 = scmp.ge.s32.totalorder %s8, 4
      %s18 = sphi 0, %s20
      %s21 = sphi 0, %s18
      %s22 = sphi 0, %s21
      %s38 = sphi 0, %s22
      %s52 = sphi 0, %s54
      %s55 = sphi 0, %s52
      %s56 = sphi 0, %s55
      %s72 = sphi 0, %s56
      %s78 = sphi 0, %s80
      %s81 = sphi 0, %s78
      %s82 = sphi 0, %s81
      %s98 = sphi 0, %s82
    $region4: #{feature_extraction_forward.3} parent=1 // loop_header_branch
      %11 = sbr.rel (%p9) target = $region8
    $region5: #{feature_extraction_forward.3} parent=1 // loop_body
      %s13 = ssub.s32 %s8, 1
      %s14 = ssub.s32 %s8, 2
      %s15 = sadd.s32 %s8, 1
      %s16 = ssub.s32 %s8, %s15
      %p17 = scmp.eq.s32.totalorder %s16, 0
      %s19 = sadd.s32 %s18, 1
      %s20 = scalar_select %p17, %s18, %s19
      %p23 = pneg %p17
      %p24 = scmp.eq.s32.totalorder %s8, 1
      %p25 = por %p23, %p24
      %p26 = scmp.ne.s32.totalorder %s18, %s21
      %p27 = scmp.eq.s32.totalorder %s8, 0
      %p28 = por %p26, %p27
      %p29 = scmp.ne.s32.totalorder %s18, %s21
      %p30 = scmp.eq.s32.totalorder %s13, 1
      %p31 = por %p29, %p30
      %p32 = scmp.ne.s32.totalorder %s21, %s22
      %p33 = scmp.eq.s32.totalorder %s13, 0
      %p34 = por %p32, %p33
      %p35 = scmp.ne.s32.totalorder %s21, %s22
      %p36 = scmp.eq.s32.totalorder %s14, 1
      %p37 = por %p35, %p36
      %p39 = scmp.ne.s32.totalorder %s22, %s38
      %p40 = scmp.eq.s32.totalorder %s14, 0
      %p41 = por %p39, %p40
      %s42 = smul.u32 %s8, 2
      %s43 = ssub.s32 %s42, 1
      %p44 = scmp.gt.s32.totalorder %s43, 0
      %s45 = scalar_select %p44, %s43, 0
      %s46 = smul.u32 %s15, 2
      %s47 = ssub.s32 %s46, 1
      %p48 = scmp.gt.s32.totalorder %s47, 0
      %s49 = scalar_select %p48, %s47, 0
      %s50 = ssub.s32 %s45, %s49
      %p51 = scmp.eq.s32.totalorder %s50, 0
      %s53 = sadd.s32 %s52, 1
      %s54 = scalar_select %p51, %s52, %s53
      %p57 = pneg %p51
      %p58 = scmp.eq.s32.totalorder %s8, 1
      %p59 = por %p57, %p58
      %p60 = scmp.ne.s32.totalorder %s52, %s55
      %p61 = scmp.eq.s32.totalorder %s8, 0
      %p62 = por %p60, %p61
      %p63 = scmp.ne.s32.totalorder %s52, %s55
      %p64 = scmp.eq.s32.totalorder %s13, 1
      %p65 = por %p63, %p64
      %p66 = scmp.ne.s32.totalorder %s55, %s56
      %p67 = scmp.eq.s32.totalorder %s13, 0
      %p68 = por %p66, %p67
      %p69 = scmp.ne.s32.totalorder %s55, %s56
      %p70 = scmp.eq.s32.totalorder %s14, 1
      %p71 = por %p69, %p70
      %p73 = scmp.ne.s32.totalorder %s56, %s72
      %p74 = scmp.eq.s32.totalorder %s14, 0
      %p75 = por %p73, %p74
      %s76 = ssub.s32 %s8, %s15
      %p77 = scmp.eq.s32.totalorder %s76, 0
      %s79 = sadd.s32 %s78, 1
      %s80 = scalar_select %p77, %s78, %s79
      %p83 = pneg %p77
      %p84 = scmp.eq.s32.totalorder %s8, 1
      %p85 = por %p83, %p84
      %p86 = scmp.ne.s32.totalorder %s78, %s81
      %p87 = scmp.eq.s32.totalorder %s8, 0
      %p88 = por %p86, %p87
      %p89 = scmp.ne.s32.totalorder %s78, %s81
      %p90 = scmp.eq.s32.totalorder %s13, 1
      %p91 = por %p89, %p90
      %p92 = scmp.ne.s32.totalorder %s81, %s82
      %p93 = scmp.eq.s32.totalorder %s13, 0
      %p94 = por %p92, %p93
      %p95 = scmp.ne.s32.totalorder %s81, %s82
      %p96 = scmp.eq.s32.totalorder %s14, 1
      %p97 = por %p95, %p96
      %p99 = scmp.ne.s32.totalorder %s82, %s98
      %p100 = scmp.eq.s32.totalorder %s14, 0
      %p101 = por %p99, %p100
      %p102 = scmp.le.s32.totalorder 1, %s8
      %p103 = scmp.lt.s32.totalorder %s8, 3
      %p104 = pnand %p102, %p103
      %p105 = pneg %p104
      // Predicated region
      $region9: #{feature_extraction_forward.3} parent=5 // pred_check
        _
      $region10: #{feature_extraction_forward.3} parent=5 // pred_check_branch
        %107 = sbr.rel (%p104) target = $region12
      $region11: #{feature_extraction_forward.3} parent=5 // pred_region
        %s108 = ssub.s32 %s8, 1
      $region12: #{feature_extraction_forward.3} parent=5 // pred_fallthru
        _
      %p109 = scmp.lt.s32.totalorder %s8, 2
      // Predicated region
      $region13: #{feature_extraction_forward.3} parent=5 // pred_check
        %p110 = pneg %p109
      $region14: #{feature_extraction_forward.3} parent=5 // pred_check_branch
        %112 = sbr.rel (%p110) target = $region16
      $region15: #{feature_extraction_forward.3} parent=5 // pred_region
        // Predicated region
        $region17: #{feature_extraction_forward.3} parent=15 // pred_check
          %p113 = pneg %p28
        $region18: #{feature_extraction_forward.3} parent=15 // pred_check_branch
          %115 = sbr.rel (%p113) target = $region20
        $region19: #{feature_extraction_forward.3} parent=15 // pred_region
          %s116 = sand.u32 %s18, 1
          %s117 = sand.u32 %s18, 1
          %s118 = smul.addr %s117, 32
          %s119 = scalar_lea.vmem [#allocation3], %s118
          %s120 = smul.u32 2, %s8
          %s121 = smul.addr %s120, 2
          %s122 = smul.addr %s121, 4
          %s123 = scalar_lea.vmem %s0, %s122
          // Predicated region
          $region21: #{feature_extraction_forward.3} parent=19 // pred_check
            _
          $region22: #{feature_extraction_forward.3} parent=19 // pred_check_branch
            %125 = sbr.rel (0) target = $region24
          $region23: #{feature_extraction_forward.3} parent=19 // pred_region
            // Predicated region
            $region25: #{feature_extraction_forward.3} parent=23 // pred_check
              _
            $region26: #{feature_extraction_forward.3} parent=23 // pred_check_branch
              %127 = sbr.rel target = $region28
            $region27: #{feature_extraction_forward.3} parent=23 // pred_region
              // Predicated region
              $region40: #{feature_extraction_forward.3} parent=27 // pred_check
                _
              $region41: #{feature_extraction_forward.3} parent=27 // pred_check_branch
                %156 = sbr.rel (0) target = $region43
              $region42: #{feature_extraction_forward.3} parent=27 // pred_region
                loop: start=0, step=1, limit=1
                $region44: #{feature_extraction_forward.3} parent=42 // loop_pre_header
                  _
                $region45: #{feature_extraction_forward.3} parent=42 // loop_header
                  %s158 = sphi 0, %s162
                  %p159 = scmp.ge.s32.totalorder %s158, 1
                  %s163 = sphi %s123, %s123
                  %s164 = sphi %s119, %s119
                $region46: #{feature_extraction_forward.3} parent=42 // loop_header_branch
                  %161 = sbr.rel (%p159) target = $region50
                $region47: #{feature_extraction_forward.3} parent=42 // loop_body
                  _
                $region48: #{feature_extraction_forward.3} parent=42 // loop_footer
                  %s162 = sadd.s32 1, %s158
                $region49: #{feature_extraction_forward.3} parent=42 // loop_footer_branch
                  %157 = sbr.rel target = $region45
                $region50: #{feature_extraction_forward.3} parent=42 // loop_exit
                  _
                loop: start=0, step=1, limit=1
                $region51: #{feature_extraction_forward.3} parent=42 // loop_pre_header
                  _
                $region52: #{feature_extraction_forward.3} parent=42 // loop_header
                  %s167 = sphi 0, %s171
                  %p168 = scmp.ge.s32.totalorder %s167, 1
                  %s172 = sphi %s123, %s123
                  %s173 = sphi %s119, %s119
                $region53: #{feature_extraction_forward.3} parent=42 // loop_header_branch
                  %170 = sbr.rel (%p168) target = $region57
                $region54: #{feature_extraction_forward.3} parent=42 // loop_body
                  %v174 = vld [vmem:[%s172] sm:$0xf]
                  %175 = vst [vmem:[%s173] sm:$0xf] %v174
                  %v176 = vld [vmem:[%s172 + $0x4] sm:$0xf]
                  %177 = vst [vmem:[%s173 + $0x4] sm:$0xf] %v176
                  %v178 = vld [vmem:[%s172 + $0x8] sm:$0xf]
                  %179 = vst [vmem:[%s173 + $0x8] sm:$0xf] %v178
                  %v180 = vld [vmem:[%s172 + $0xc] sm:$0xf]
                  %181 = vst [vmem:[%s173 + $0xc] sm:$0xf] %v180
                  %v182 = vld [vmem:[%s172 + $0x20] sm:$0xf]
                  %183 = vst [vmem:[%s173 + $0x10] sm:$0xf] %v182
                  %v184 = vld [vmem:[%s172 + $0x24] sm:$0xf]
                  %185 = vst [vmem:[%s173 + $0x14] sm:$0xf] %v184
                  %v186 = vld [vmem:[%s172 + $0x28] sm:$0xf]
                  %187 = vst [vmem:[%s173 + $0x18] sm:$0xf] %v186
                  %v188 = vld [vmem:[%s172 + $0x2c] sm:$0xf]
                  %189 = vst [vmem:[%s173 + $0x1c] sm:$0xf] %v188
                $region55: #{feature_extraction_forward.3} parent=42 // loop_footer
                  %s171 = sadd.s32 1, %s167
                $region56: #{feature_extraction_forward.3} parent=42 // loop_footer_branch
                  %166 = sbr.rel target = $region52
                $region57: #{feature_extraction_forward.3} parent=42 // loop_exit
                  _
              $region43: #{feature_extraction_forward.3} parent=27 // pred_fallthru
                _
            $region28: #{feature_extraction_forward.3} parent=23 // pred_fallthru
              _
            // Predicated region
            $region29: #{feature_extraction_forward.3} parent=23 // pred_check
              _
            $region30: #{feature_extraction_forward.3} parent=23 // pred_check_branch
              %129 = sbr.rel (0) target = $region32
            $region31: #{feature_extraction_forward.3} parent=23 // pred_region
              loop: start=0, step=1, limit=1
              $region33: #{feature_extraction_forward.3} parent=31 // loop_pre_header
                _
              $region34: #{feature_extraction_forward.3} parent=31 // loop_header
                %s132 = sphi 0, %s136
                %p133 = scmp.ge.s32.totalorder %s132, 1
                %s137 = sphi %s123, %s123
                %s138 = sphi %s119, %s119
              $region35: #{feature_extraction_forward.3} parent=31 // loop_header_branch
                %135 = sbr.rel (%p133) target = $region39
              $region36: #{feature_extraction_forward.3} parent=31 // loop_body
                %v139 = vld [vmem:[%s137] sm:$0xf]
                %140 = vst [vmem:[%s138] sm:$0xf] %v139
                %v141 = vld [vmem:[%s137 + $0x4] sm:$0xf]
                %142 = vst [vmem:[%s138 + $0x4] sm:$0xf] %v141
                %v143 = vld [vmem:[%s137 + $0x8] sm:$0xf]
                %144 = vst [vmem:[%s138 + $0x8] sm:$0xf] %v143
                %v145 = vld [vmem:[%s137 + $0xc] sm:$0xf]
                %146 = vst [vmem:[%s138 + $0xc] sm:$0xf] %v145
                %v147 = vld [vmem:[%s137 + $0x20] sm:$0xf]
                %148 = vst [vmem:[%s138 + $0x10] sm:$0xf] %v147
                %v149 = vld [vmem:[%s137 + $0x24] sm:$0xf]
                %150 = vst [vmem:[%s138 + $0x14] sm:$0xf] %v149
                %v151 = vld [vmem:[%s137 + $0x28] sm:$0xf]
                %152 = vst [vmem:[%s138 + $0x18] sm:$0xf] %v151
                %v153 = vld [vmem:[%s137 + $0x2c] sm:$0xf]
                %154 = vst [vmem:[%s138 + $0x1c] sm:$0xf] %v153
              $region37: #{feature_extraction_forward.3} parent=31 // loop_footer
                %s136 = sadd.s32 1, %s132
              $region38: #{feature_extraction_forward.3} parent=31 // loop_footer_branch
                %131 = sbr.rel target = $region34
              $region39: #{feature_extraction_forward.3} parent=31 // loop_exit
                _
            $region32: #{feature_extraction_forward.3} parent=23 // pred_fallthru
              _
          $region24: #{feature_extraction_forward.3} parent=19 // pred_fallthru
            _
          %190 = vnop
        $region20: #{feature_extraction_forward.3} parent=15 // pred_fallthru
          _
        // Predicated region
        $region58: #{feature_extraction_forward.3} parent=15 // pred_check
          %p191 = pneg %p62
        $region59: #{feature_extraction_forward.3} parent=15 // pred_check_branch
          %193 = sbr.rel (%p191) target = $region61
        $region60: #{feature_extraction_forward.3} parent=15 // pred_region
          %s194 = sand.u32 %s52, 1
          %s195 = sand.u32 %s52, 1
          %s196 = smul.addr %s195, 8
          %s197 = scalar_lea.vmem [#allocation4], %s196
          %s198 = smul.u32 %s8, 2
          %s199 = ssub.s32 %s198, 1
          %p200 = scmp.gt.s32.totalorder %s199, 0
          %s201 = scalar_select %p200, %s199, 0
          %s202 = smul.addr %s201, 2
          %s203 = sadd.s32 1, %s202
          %s204 = smul.addr %s203, 4
          %s205 = scalar_lea.vmem %s1, %s204
          // Predicated region
          $region62: #{feature_extraction_forward.3} parent=60 // pred_check
            _
          $region63: #{feature_extraction_forward.3} parent=60 // pred_check_branch
            %207 = sbr.rel (0) target = $region65
          $region64: #{feature_extraction_forward.3} parent=60 // pred_region
            // Predicated region
            $region66: #{feature_extraction_forward.3} parent=64 // pred_check
              _
            $region67: #{feature_extraction_forward.3} parent=64 // pred_check_branch
              %209 = sbr.rel target = $region69
            $region68: #{feature_extraction_forward.3} parent=64 // pred_region
              // Predicated region
              $region81: #{feature_extraction_forward.3} parent=68 // pred_check
                _
              $region82: #{feature_extraction_forward.3} parent=68 // pred_check_branch
                %226 = sbr.rel (0) target = $region84
              $region83: #{feature_extraction_forward.3} parent=68 // pred_region
                loop: start=0, step=1, limit=1
                $region85: #{feature_extraction_forward.3} parent=83 // loop_pre_header
                  _
                $region86: #{feature_extraction_forward.3} parent=83 // loop_header
                  %s228 = sphi 0, %s232
                  %p229 = scmp.ge.s32.totalorder %s228, 1
                  %s233 = sphi %s205, %s205
                  %s234 = sphi %s197, %s197
                $region87: #{feature_extraction_forward.3} parent=83 // loop_header_branch
                  %231 = sbr.rel (%p229) target = $region91
                $region88: #{feature_extraction_forward.3} parent=83 // loop_body
                  _
                $region89: #{feature_extraction_forward.3} parent=83 // loop_footer
                  %s232 = sadd.s32 1, %s228
                $region90: #{feature_extraction_forward.3} parent=83 // loop_footer_branch
                  %227 = sbr.rel target = $region86
                $region91: #{feature_extraction_forward.3} parent=83 // loop_exit
                  _
                loop: start=0, step=1, limit=1
                $region92: #{feature_extraction_forward.3} parent=83 // loop_pre_header
                  _
                $region93: #{feature_extraction_forward.3} parent=83 // loop_header
                  %s237 = sphi 0, %s241
                  %p238 = scmp.ge.s32.totalorder %s237, 1
                  %s242 = sphi %s205, %s205
                  %s243 = sphi %s197, %s197
                $region94: #{feature_extraction_forward.3} parent=83 // loop_header_branch
                  %240 = sbr.rel (%p238) target = $region98
                $region95: #{feature_extraction_forward.3} parent=83 // loop_body
                  %v244 = vld [vmem:[%s242] sm:$0xf]
                  %245 = vst [vmem:[%s243] sm:$0xf] %v244
                  %v246 = vld [vmem:[%s242 + $0x20] sm:$0xf]
                  %247 = vst [vmem:[%s243 + $0x4] sm:$0xf] %v246
                $region96: #{feature_extraction_forward.3} parent=83 // loop_footer
                  %s241 = sadd.s32 1, %s237
                $region97: #{feature_extraction_forward.3} parent=83 // loop_footer_branch
                  %236 = sbr.rel target = $region93
                $region98: #{feature_extraction_forward.3} parent=83 // loop_exit
                  _
              $region84: #{feature_extraction_forward.3} parent=68 // pred_fallthru
                _
            $region69: #{feature_extraction_forward.3} parent=64 // pred_fallthru
              _
            // Predicated region
            $region70: #{feature_extraction_forward.3} parent=64 // pred_check
              _
            $region71: #{feature_extraction_forward.3} parent=64 // pred_check_branch
              %211 = sbr.rel (0) target = $region73
            $region72: #{feature_extraction_forward.3} parent=64 // pred_region
              loop: start=0, step=1, limit=1
              $region74: #{feature_extraction_forward.3} parent=72 // loop_pre_header
                _
              $region75: #{feature_extraction_forward.3} parent=72 // loop_header
                %s214 = sphi 0, %s218
                %p215 = scmp.ge.s32.totalorder %s214, 1
                %s219 = sphi %s205, %s205
                %s220 = sphi %s197, %s197
              $region76: #{feature_extraction_forward.3} parent=72 // loop_header_branch
                %217 = sbr.rel (%p215) target = $region80
              $region77: #{feature_extraction_forward.3} parent=72 // loop_body
                %v221 = vld [vmem:[%s219] sm:$0xf]
                %222 = vst [vmem:[%s220] sm:$0xf] %v221
                %v223 = vld [vmem:[%s219 + $0x20] sm:$0xf]
                %224 = vst [vmem:[%s220 + $0x4] sm:$0xf] %v223
              $region78: #{feature_extraction_forward.3} parent=72 // loop_footer
                %s218 = sadd.s32 1, %s214
              $region79: #{feature_extraction_forward.3} parent=72 // loop_footer_branch
                %213 = sbr.rel target = $region75
              $region80: #{feature_extraction_forward.3} parent=72 // loop_exit
                _
            $region73: #{feature_extraction_forward.3} parent=64 // pred_fallthru
              _
          $region65: #{feature_extraction_forward.3} parent=60 // pred_fallthru
            _
          %248 = vnop
        $region61: #{feature_extraction_forward.3} parent=15 // pred_fallthru
          _
      $region16: #{feature_extraction_forward.3} parent=5 // pred_fallthru
        _
      %p249 = scmp.le.s32.totalorder 1, %s8
      %p250 = scmp.lt.s32.totalorder %s8, 3
      %p251 = pnand %p249, %p250
      %p252 = pneg %p251
      // Predicated region
      $region99: #{feature_extraction_forward.3} parent=5 // pred_check
        _
      $region100: #{feature_extraction_forward.3} parent=5 // pred_check_branch
        %254 = sbr.rel (%p251) target = $region102
      $region101: #{feature_extraction_forward.3} parent=5 // pred_region
        %s255 = ssub.s32 %s8, 1
        %s256 = sand.u32 %s21, 1
        %s257 = sand.u32 %s21, 1
        %s258 = smul.addr %s257, 32
        %s259 = scalar_lea.vmem [#allocation3], %s258
        // Predicated region
        $region103: #{feature_extraction_forward.3} parent=101 // pred_check
          %p260 = pneg %p34
        $region104: #{feature_extraction_forward.3} parent=101 // pred_check_branch
          %262 = sbr.rel (%p260) target = $region106
        $region105: #{feature_extraction_forward.3} parent=101 // pred_region
          _
        $region106: #{feature_extraction_forward.3} parent=101 // pred_fallthru
          _
        %s263 = sand.u32 %s55, 1
        %s264 = sand.u32 %s55, 1
        %s265 = smul.addr %s264, 8
        %s266 = scalar_lea.vmem [#allocation4], %s265
        // Predicated region
        $region107: #{feature_extraction_forward.3} parent=101 // pred_check
          %p267 = pneg %p68
        $region108: #{feature_extraction_forward.3} parent=101 // pred_check_branch
          %269 = sbr.rel (%p267) target = $region110
        $region109: #{feature_extraction_forward.3} parent=101 // pred_region
          _
        $region110: #{feature_extraction_forward.3} parent=101 // pred_fallthru
          _
        %s270 = sand.u32 %s21, 1
        %s271 = sand.u32 %s21, 1
        %s272 = smul.addr %s271, 32
        %s273 = scalar_lea.vmem [#allocation3], %s272
        %p274 = pneg %p34
        %p275 = pneg %p31
        %s276 = sand.u32 %s55, 1
        %s277 = sand.u32 %s55, 1
        %s278 = smul.addr %s277, 8
        %s279 = scalar_lea.vmem [#allocation4], %s278
        %p280 = pneg %p68
        %p281 = pneg %p65
        %p282 = pneg %p94
        %p283 = pneg %p91
        %s284 = sand.u32 %s81, 1
        %s285 = sand.u32 %s81, 1
        %s286 = smul.addr %s285, 16
        %s287 = scalar_lea.vmem [#allocation5], %s286
        %s288 = smul.u32 2, %s13
        %s289 = smul.u32 %s13, 2
        %s290 = ssub.s32 %s289, 1
        %p291 = scmp.gt.s32.totalorder %s290, 0
        %s292 = scalar_select %p291, %s290, 0
        %s293 = smul.u32 2, %s13
        %v294 = vld [vmem:[%s259] sm:$0xf]
        %v295 = vld [vmem:[%s259 + $0x8] sm:$0xf]
        %v296 = vld [vmem:[%s259 + $0x10] sm:$0xf]
        %v297 = vld [vmem:[%s259 + $0x18] sm:$0xf]
        %v298 = vunpack.c.l.bf16 %v294
        %v299 = vunpack.c.l.bf16 %v295
        %v300 = vunpack.c.l.bf16 %v296
        %v301 = vunpack.c.l.bf16 %v297
        %s302 = scalar_lea.vmem %s259, 4 [#allocation3]
        %v303 = vld [vmem:[%s302] sm:$0xf]
        %v304 = vld [vmem:[%s302 + $0x8] sm:$0xf]
        %v305 = vld [vmem:[%s302 + $0x10] sm:$0xf]
        %v306 = vld [vmem:[%s302 + $0x18] sm:$0xf]
        %v307 = vunpack.c.l.bf16 %v303
        %v308 = vunpack.c.l.bf16 %v304
        %v309 = vunpack.c.l.bf16 %v305
        %v310 = vunpack.c.l.bf16 %v306
        %v311 = vld [vmem:[%s266] sm:$0xf]
        %v312 = vld [vmem:[%s266 + $0x4] sm:$0xf]
        %v313 = vunpack.c.l.bf16 %v311
        %v314 = vunpack.c.l.bf16 %v312
        %p315 = scmp.gt.s32.totalorder %s13, 0
        %s316 = scalar_select %p315, 1, 0
        %v317 = vstv %s316
        %vm318 = vcmp.eq.s32.totalorder %v317, 1
        %v319 = vsel %vm318, %v313, 0.0
        %v320 = vsel %vm318, %v314, 0.0
        %v321 = vmax.f32 %v298, %v307
        %v322 = vmax.f32 %v299, %v308
        %v323 = vmax.f32 %v300, %v309
        %v324 = vmax.f32 %v301, %v310
        %v325 = vmax.f32 %v321, %v319
        %v326 = vmax.f32 %v322, %v307
        %v327 = vmax.f32 %v323, %v320
        %v328 = vmax.f32 %v324, %v309
        %329 = vst [vmem:[#allocation2] sm:$0x1] 0.0
        %330 = vst [vmem:[#allocation2 + $0x10] sm:$0x1] 0.0
        %331 = vst [vmem:[#allocation2 + $0x20] sm:$0x1] 0.0
        %332 = vst [vmem:[#allocation2 + $0x30] sm:$0x1] 0.0
        %333 = vst [vmem:[#allocation2 + $0x1] sm:$0xff] %v325
        %334 = vst [vmem:[#allocation2 + $0x11] sm:$0xff] %v326
        %335 = vst [vmem:[#allocation2 + $0x21] sm:$0xff] %v327
        %336 = vst [vmem:[#allocation2 + $0x31] sm:$0xff] %v328
        %v337 = vld [vmem:[#allocation2] ss:$2 sm:$0xf]
        %s338 = scalar_lea.vmem [#allocation2], 16
        %v339 = vld [vmem:[%s338] ss:$2 sm:$0xf]
        %s340 = scalar_lea.vmem [#allocation2], 32
        %v341 = vld [vmem:[%s340] ss:$2 sm:$0xf]
        %s342 = scalar_lea.vmem [#allocation2], 48
        %v343 = vld [vmem:[%s342] ss:$2 sm:$0xf]
        %s344 = scalar_lea.vmem [#allocation2], 1
        %v345 = vld [vmem:[%s344] ss:$2 sm:$0xf]
        %s346 = scalar_lea.vmem [#allocation2], 17
        %v347 = vld [vmem:[%s346] ss:$2 sm:$0xf]
        %s348 = scalar_lea.vmem [#allocation2], 33
        %v349 = vld [vmem:[%s348] ss:$2 sm:$0xf]
        %s350 = scalar_lea.vmem [#allocation2], 49
        %v351 = vld [vmem:[%s350] ss:$2 sm:$0xf]
        %s352 = scalar_lea.vmem [#allocation2], 2
        %v353 = vld [vmem:[%s352] ss:$2 sm:$0xf]
        %s354 = scalar_lea.vmem [#allocation2], 18
        %v355 = vld [vmem:[%s354] ss:$2 sm:$0xf]
        %s356 = scalar_lea.vmem [#allocation2], 34
        %v357 = vld [vmem:[%s356] ss:$2 sm:$0xf]
        %s358 = scalar_lea.vmem [#allocation2], 50
        %v359 = vld [vmem:[%s358] ss:$2 sm:$0xf]
        %v360 = vmax.f32 %v337, %v345
        %v361 = vmax.f32 %v339, %v347
        %v362 = vmax.f32 %v341, %v349
        %v363 = vmax.f32 %v343, %v351
        %v364 = vmax.f32 %v360, %v353
        %v365 = vmax.f32 %v361, %v355
        %v366 = vmax.f32 %v362, %v357
        %v367 = vmax.f32 %v363, %v359
        %v368 = vmul.f32 %v364, %v364
        %v369 = vmul.f32 %v365, %v365
        %v370 = vmul.f32 %v366, %v366
        %v371 = vmul.f32 %v367, %v367
        %vm372 = vcmask 1043456
        %v373 = vsel %vm372, %v368, 0.0
        %374 = vadd.xlane.f32.xlu0 %v373
        %v375 = vpop.xlane.xlu0 %374
        %v376 = vsel %vm372, %v369, 0.0
        %377 = vadd.xlane.f32.xlu0 %v376
        %v378 = vpop.xlane.xlu0 %377
        %v379 = vsel %vm372, %v370, 0.0
        %380 = vadd.xlane.f32.xlu0 %v379
        %v381 = vpop.xlane.xlu0 %380
        %v382 = vsel %vm372, %v371, 0.0
        %383 = vadd.xlane.f32.xlu0 %v382
        %v384 = vpop.xlane.xlu0 %383
        %v385 = vadd.f32 %v375, 1e-06
        %v386 = vadd.f32 %v378, 1e-06
        %v387 = vadd.f32 %v381, 1e-06
        %v388 = vadd.f32 %v384, 1e-06
        %v389 = vrsqrt.pop %v385
        %v390 = vrsqrt.pop %v386
        %v391 = vrsqrt.pop %v387
        %v392 = vrsqrt.pop %v388
        %v393 = vmul.f32 %v364, %v389
        %v394 = vmul.f32 %v365, %v390
        %v395 = vmul.f32 %v366, %v391
        %v396 = vmul.f32 %v367, %v392
        %397 = vst [vmem:[%s287] sm:$0xf] %v393
        %398 = vst [vmem:[%s287 + $0x4] sm:$0xf] %v394
        %399 = vst [vmem:[%s287 + $0x8] sm:$0xf] %v395
        %400 = vst [vmem:[%s287 + $0xc] sm:$0xf] %v396
        %s401 = sand.u32 %s81, 1
        %s402 = sand.u32 %s81, 1
        %s403 = smul.addr %s402, 16
        %s404 = scalar_lea.vmem [#allocation5], %s403
        // Predicated region
        $region111: #{feature_extraction_forward.3} parent=101 // pred_check
          %p405 = pneg %p91
        $region112: #{feature_extraction_forward.3} parent=101 // pred_check_branch
          %407 = sbr.rel (%p405) target = $region114
        $region113: #{feature_extraction_forward.3} parent=101 // pred_region
          %s408 = smul.u32 2, %s13
          %s409 = smul.addr %s408, 4
          %s410 = scalar_lea.vmem %s2, %s409
          // Predicated region
          $region115: #{feature_extraction_forward.3} parent=113 // pred_check
            _
          $region116: #{feature_extraction_forward.3} parent=113 // pred_check_branch
            %412 = sbr.rel (0) target = $region118
          $region117: #{feature_extraction_forward.3} parent=113 // pred_region
            // Predicated region
            $region119: #{feature_extraction_forward.3} parent=117 // pred_check
              _
            $region120: #{feature_extraction_forward.3} parent=117 // pred_check_branch
              %414 = sbr.rel target = $region122
            $region121: #{feature_extraction_forward.3} parent=117 // pred_region
              // Predicated region
              $region134: #{feature_extraction_forward.3} parent=121 // pred_check
                _
              $region135: #{feature_extraction_forward.3} parent=121 // pred_check_branch
                %435 = sbr.rel (0) target = $region137
              $region136: #{feature_extraction_forward.3} parent=121 // pred_region
                loop: start=0, step=1, limit=1
                $region138: #{feature_extraction_forward.3} parent=136 // loop_pre_header
                  _
                $region139: #{feature_extraction_forward.3} parent=136 // loop_header
                  %s437 = sphi 0, %s441
                  %p438 = scmp.ge.s32.totalorder %s437, 1
                  %s442 = sphi %s404, %s404
                  %s443 = sphi %s410, %s410
                $region140: #{feature_extraction_forward.3} parent=136 // loop_header_branch
                  %440 = sbr.rel (%p438) target = $region144
                $region141: #{feature_extraction_forward.3} parent=136 // loop_body
                  _
                $region142: #{feature_extraction_forward.3} parent=136 // loop_footer
                  %s441 = sadd.s32 1, %s437
                $region143: #{feature_extraction_forward.3} parent=136 // loop_footer_branch
                  %436 = sbr.rel target = $region139
                $region144: #{feature_extraction_forward.3} parent=136 // loop_exit
                  _
                loop: start=0, step=1, limit=1
                $region145: #{feature_extraction_forward.3} parent=136 // loop_pre_header
                  _
                $region146: #{feature_extraction_forward.3} parent=136 // loop_header
                  %s446 = sphi 0, %s450
                  %p447 = scmp.ge.s32.totalorder %s446, 1
                  %s451 = sphi %s404, %s404
                  %s452 = sphi %s410, %s410
                $region147: #{feature_extraction_forward.3} parent=136 // loop_header_branch
                  %449 = sbr.rel (%p447) target = $region151
                $region148: #{feature_extraction_forward.3} parent=136 // loop_body
                  %v453 = vld [vmem:[%s451] sm:$0xf]
                  %454 = vst [vmem:[%s452] sm:$0xf] %v453
                  %v455 = vld [vmem:[%s451 + $0x4] sm:$0xf]
                  %456 = vst [vmem:[%s452 + $0x4] sm:$0xf] %v455
                  %v457 = vld [vmem:[%s451 + $0x8] sm:$0xf]
                  %458 = vst [vmem:[%s452 + $0x10] sm:$0xf] %v457
                  %v459 = vld [vmem:[%s451 + $0xc] sm:$0xf]
                  %460 = vst [vmem:[%s452 + $0x14] sm:$0xf] %v459
                $region149: #{feature_extraction_forward.3} parent=136 // loop_footer
                  %s450 = sadd.s32 1, %s446
                $region150: #{feature_extraction_forward.3} parent=136 // loop_footer_branch
                  %445 = sbr.rel target = $region146
                $region151: #{feature_extraction_forward.3} parent=136 // loop_exit
                  _
              $region137: #{feature_extraction_forward.3} parent=121 // pred_fallthru
                _
            $region122: #{feature_extraction_forward.3} parent=117 // pred_fallthru
              _
            // Predicated region
            $region123: #{feature_extraction_forward.3} parent=117 // pred_check
              _
            $region124: #{feature_extraction_forward.3} parent=117 // pred_check_branch
              %416 = sbr.rel (0) target = $region126
            $region125: #{feature_extraction_forward.3} parent=117 // pred_region
              loop: start=0, step=1, limit=1
              $region127: #{feature_extraction_forward.3} parent=125 // loop_pre_header
                _
              $region128: #{feature_extraction_forward.3} parent=125 // loop_header
                %s419 = sphi 0, %s423
                %p420 = scmp.ge.s32.totalorder %s419, 1
                %s424 = sphi %s404, %s404
                %s425 = sphi %s410, %s410
              $region129: #{feature_extraction_forward.3} parent=125 // loop_header_branch
                %422 = sbr.rel (%p420) target = $region133
              $region130: #{feature_extraction_forward.3} parent=125 // loop_body
                %v426 = vld [vmem:[%s424] sm:$0xf]
                %427 = vst [vmem:[%s425] sm:$0xf] %v426
                %v428 = vld [vmem:[%s424 + $0x4] sm:$0xf]
                %429 = vst [vmem:[%s425 + $0x4] sm:$0xf] %v428
                %v430 = vld [vmem:[%s424 + $0x8] sm:$0xf]
                %431 = vst [vmem:[%s425 + $0x10] sm:$0xf] %v430
                %v432 = vld [vmem:[%s424 + $0xc] sm:$0xf]
                %433 = vst [vmem:[%s425 + $0x14] sm:$0xf] %v432
              $region131: #{feature_extraction_forward.3} parent=125 // loop_footer
                %s423 = sadd.s32 1, %s419
              $region132: #{feature_extraction_forward.3} parent=125 // loop_footer_branch
                %418 = sbr.rel target = $region128
              $region133: #{feature_extraction_forward.3} parent=125 // loop_exit
                _
            $region126: #{feature_extraction_forward.3} parent=117 // pred_fallthru
              _
          $region118: #{feature_extraction_forward.3} parent=113 // pred_fallthru
            _
          %461 = vnop
        $region114: #{feature_extraction_forward.3} parent=101 // pred_fallthru
          _
      $region102: #{feature_extraction_forward.3} parent=5 // pred_fallthru
        _
      %p462 = scmp.le.s32.totalorder 2, %s8
      // Predicated region
      $region152: #{feature_extraction_forward.3} parent=5 // pred_check
        %p463 = pneg %p462
      $region153: #{feature_extraction_forward.3} parent=5 // pred_check_branch
        %465 = sbr.rel (%p463) target = $region155
      $region154: #{feature_extraction_forward.3} parent=5 // pred_region
        %s466 = ssub.s32 %s8, 2
        // Predicated region
        $region156: #{feature_extraction_forward.3} parent=154 // pred_check
          %p467 = pneg %p97
        $region157: #{feature_extraction_forward.3} parent=154 // pred_check_branch
          %469 = sbr.rel (%p467) target = $region159
        $region158: #{feature_extraction_forward.3} parent=154 // pred_region
          %s470 = sand.u32 %s82, 1
          %s471 = sand.u32 %s82, 1
          %s472 = smul.addr %s471, 16
          %s473 = scalar_lea.vmem [#allocation5], %s472
        $region159: #{feature_extraction_forward.3} parent=154 // pred_fallthru
          _
      $region155: #{feature_extraction_forward.3} parent=5 // pred_fallthru
        _
    $region6: #{feature_extraction_forward.3} parent=1 // loop_footer
      %s12 = sadd.s32 1, %s8
    $region7: #{feature_extraction_forward.3} parent=1 // loop_footer_branch
      %7 = sbr.rel target = $region3
    $region8: #{feature_extraction_forward.3} parent=1 // loop_exit
      _

</llo_original>
